<compile_context>
chip_gen: v7x
topology: tpu7x:2x2x1
jax: 0.10.0
libtpu: 0.0.40
codegen_flags: <defaults>
</compile_context>

<pallas_src>
import jax
import jax.numpy as jnp
from jax.experimental import pallas as pl
from jax.experimental.pallas import tpu as pltpu


def _copy_kernel(x_ref, o_ref):
    # Pure aligned 2D copy; the flatten already happened (free) in the wrapper.
    o_ref[...] = x_ref[...]


_TARGET_BLOCK_BYTES = 8 * 1024 * 1024      # ~8 MiB per block (amortizes 0.35us/step)
_VMEM_LIMIT_BYTES = 48 * 1024 * 1024       # explicit budget; < 64 MiB v7x physical
_LANE = 128
_MAX_LANE_WIDTH = 2048


def _sublane_multiple(itemsize: int) -> int:
    # Sub-32-bit dtypes pack along sublanes: f32 -> 8, bf16 -> 16, int8/fp8 -> 32.
    return max(8, (8 * 4) // max(1, itemsize))


def flatten(x: jax.Array, *, min_kernel_bytes: int = 1 << 20) -> jax.Array:
    """Flatten all dims after the batch dim, exactly like x.view(x.size(0), -1)."""
    B = x.shape[0]
    D = 1
    for s in x.shape[1:]:
        D *= s

    # Zero-copy metadata reshape (contiguous row-major) == torch .view(B, -1).
    x2 = jnp.reshape(x, (B, D))

    itemsize = jnp.dtype(x.dtype).itemsize
    n = B * D
    nbytes = n * itemsize

    # Tiny inputs: the reshape *is* the answer; a copy kernel is pure overhead.
    if nbytes < min_kernel_bytes:
        return x2

    sub = _sublane_multiple(itemsize)

    if n % _LANE == 0:
        # Re-tile the flat contiguous buffer into a lane-dense (R, L) slab so
        # all stores are unmasked, regardless of whether D is a multiple of 128.
        L = _LANE
        while (n % (L * 2) == 0) and (L * 2 <= _MAX_LANE_WIDTH):
            L *= 2
        R = n // L
        x_k = x2.reshape(R, L)
    else:
        # Ragged total size: fall back to (B, D) with a full-extent last dim
        # (legal for any D; only the tail lanes are masked on store).
        R, L = B, D
        x_k = x2

    row_bytes = L * itemsize
    if R <= sub:
        tr = R                              # full-extent sublane dim is always legal
    else:
        tr = max(sub, (_TARGET_BLOCK_BYTES // row_bytes) // sub * sub)
        tr = min(tr, (R // sub) * sub)
        # v7x megacore: keep >= 2 parallel blocks so both TensorCores get work.
        if pl.cdiv(R, tr) < 2 and tr > sub:
            tr = max(sub, (tr // 2) // sub * sub)

    if tr * row_bytes > _VMEM_LIMIT_BYTES // 4:
        # Even a minimal block would blow the VMEM budget (pathological ragged D);
        # the reshape already holds the correct result, so just return it.
        return x2

    grid = (pl.cdiv(R, tr),)

    y = pl.pallas_call(
        _copy_kernel,
        out_shape=jax.ShapeDtypeStruct((R, L), x.dtype),
        grid_spec=pltpu.PrefetchScalarGridSpec(
            num_scalar_prefetch=0,
            grid=grid,
            in_specs=[pl.BlockSpec((tr, L), lambda i: (i, 0))],
            out_specs=pl.BlockSpec((tr, L), lambda i: (i, 0)),
        ),
        compiler_params=pltpu.CompilerParams(
            dimension_semantics=("parallel",),
            vmem_limit_bytes=_VMEM_LIMIT_BYTES,
        ),
        cost_estimate=pl.CostEstimate(
            flops=0,
            transcendentals=0,
            bytes_accessed=2 * nbytes,
        ),
    )(x_k)

    return y.reshape(B, D)


if __name__ == "__main__":
    # Small NCHW input consistent with a CNN feature map: (B=2, C=4, H=16, W=16)
    key = jax.random.PRNGKey(0)
    x = jax.random.normal(key, (2, 4, 16, 16), dtype=jnp.float32)

    # Reference: plain row-major reshape (== torch .view(B, -1) semantics).
    y_ref = x.reshape(x.shape[0], -1)

    # Default path: tiny input -> free metadata reshape (no kernel launch).
    y_fast = jax.block_until_ready(flatten(x))
    assert y_fast.shape == (2, 4 * 16 * 16), y_fast.shape
    assert y_fast.dtype == x.dtype
    assert bool(jnp.array_equal(y_fast, y_ref))

    # Kernel path: force the Pallas copy kernel so pallas_call is exercised
    # end-to-end (lane-dense (R, L) re-tiling of the flat buffer).
    y_kernel = jax.block_until_ready(flatten(x, min_kernel_bytes=0))
    assert y_kernel.shape == y_ref.shape
    assert y_kernel.dtype == x.dtype
    assert bool(jnp.array_equal(y_kernel, y_ref))

    print("KERNEL_OK")
</pallas_src>

<mosaic_0001>
module attributes {stable_mosaic.version = 11 : i64} {
  func.func @_copy_kernel(%arg0: i32, %arg1: memref<1x2048xf32, #tpu.memory_space<vmem>>, %arg2: memref<1x2048xf32, #tpu.memory_space<vmem>>) attributes {dimension_semantics = [#tpu.dimension_semantics<parallel>], iteration_bounds = array<i64: 1>, scalar_prefetch = 0 : i64, scratch_operands = 0 : i64, tpu.core_type = #tpu.core_type<tc>, window_params = [{transform_indices = @transform_0, window_bounds = array<i64: 1, 2048>}, {transform_indices = @transform_1, window_bounds = array<i64: 1, 2048>}]} {
    %c0 = arith.constant 0 : index
    %c0_0 = arith.constant 0 : index
    %0 = vector.load %arg1[%c0, %c0_0] : memref<1x2048xf32, #tpu.memory_space<vmem>>, vector<1x2048xf32>
    %c0_1 = arith.constant 0 : index
    %c0_2 = arith.constant 0 : index
    %1 = vector.load %arg2[%c0_1, %c0_2] : memref<1x2048xf32, #tpu.memory_space<vmem>>, vector<1x2048xf32>
    tpu.vector_store %arg2[%c0_1, %c0_2], %0 {strides = array<i32>} : memref<1x2048xf32, #tpu.memory_space<vmem>>, vector<1x2048xf32>,
    return
  }
  func.func @transform_0(%arg0: i32) -> (i32, i32) {
    %c0_i32 = arith.constant 0 : i32
    %c0_i32_0 = arith.constant 0 : i32
    return %arg0, %c0_i32 : i32, i32
  }
  func.func @transform_1(%arg0: i32) -> (i32, i32) {
    %c0_i32 = arith.constant 0 : i32
    %c0_i32_0 = arith.constant 0 : i32
    return %arg0, %c0_i32 : i32, i32
  }
}

</mosaic_0001>

<llo_original>
// kernel: tpu_custom_call.1
$region0: #{tpu_custom_call.1}
  #allocation0 [shape = 'u32[]', space=smem, size = 0x4, offset = 0x4, fixed_abs, tag = 'smem constant byte address 0x4 - core index']
  #allocation1 [shape = 'u32[144,128]{1,0:T(1,128)}', space=vmem, size = 0x12000, scoped, tag = 'internal scratch']
  %s0 = inlined_call_operand.hbm [shape: f32[1,2048], index: 0, kind: input, shape index: {}]
  %s1 = inlined_call_operand.hbm [shape: f32[1,2048], index: 1, kind: output, shape index: {}]
  %s2 = sld [smem:[#allocation0]]
  $region18: #{tpu_custom_call.1} parent=0
    _
  %s4 = ssub.s32 1, %s2
  %s5 = scalar_select 0, %s4, %s2
  $region1: #{tpu_custom_call.1} parent=0
    #allocation2 [shape = 'u8[8192]{0}', space=vmem, size = 0x2000, scoped, tag = 'input window, operand 0, single buffered']
    #allocation3 [shape = 's32[1]{0}', space=sflag, size = 0x4, scoped, tag = 'scoped memory for tpu_custom_call.1']
    #allocation4 [shape = 's32[1]{0}', space=sflag, size = 0x4, scoped, tag = 'scoped memory for tpu_custom_call.1']
    #allocation5 [shape = 'u8[8192]{0}', space=vmem, size = 0x2000, scoped, tag = 'output window, operand 0, single buffered']
    %6 = vsyncpa [#allocation3], 0
    %7 = vsyncpa [#allocation4], 0
    // Predicated region
    $region2: #{tpu_custom_call.1} parent=1 // pred_check
      _
    $region3: #{tpu_custom_call.1} parent=1 // pred_check_branch
      %9 = sbr.rel (0) target = $region5
    $region4: #{tpu_custom_call.1} parent=1 // pred_region
      %s11 = ssub.s32 256, 256
      %12 = vsyncadd [#allocation3], %s11
      %s14 = sshll.u32 [#allocation2], 4
      %s15 = int_to_ptr.vmem [resolvable:$true] %s14
      %17 = dma.hbm_to_vmem [thread:$0]  %s0, 256, %s15, [#allocation3]
    $region5: #{tpu_custom_call.1} parent=1 // pred_fallthru
      _
    // Predicated region
    $region6: #{tpu_custom_call.1} parent=1 // pred_check
      _
    $region7: #{tpu_custom_call.1} parent=1 // pred_check_branch
      %19 = sbr.rel (0) target = $region9
    $region8: #{tpu_custom_call.1} parent=1 // pred_region
      %20 = dma.done [#allocation3], 256
    $region9: #{tpu_custom_call.1} parent=1 // pred_fallthru
      _
    %v21 = vld [vmem:[#allocation2] sm:$0xff]
    %v22 = vld [vmem:[#allocation2 + $0x8] sm:$0xff]
    %23 = vst [vmem:[#allocation5] sm:$0xff] %v21
    %24 = vst [vmem:[#allocation5 + $0x8] sm:$0xff] %v22
    // Predicated region
    $region10: #{tpu_custom_call.1} parent=1 // pred_check
      _
    $region11: #{tpu_custom_call.1} parent=1 // pred_check_branch
      %26 = sbr.rel (0) target = $region13
    $region12: #{tpu_custom_call.1} parent=1 // pred_region
      %s28 = ssub.s32 256, 256
      %29 = vsyncadd [#allocation4], %s28
      %s31 = sshll.u32 [#allocation5], 4
      %s32 = int_to_ptr.vmem [resolvable:$true] %s31
      %34 = dma.vmem_to_hbm [thread:$0]  %s32, 256, %s1, [#allocation4]
    $region13: #{tpu_custom_call.1} parent=1 // pred_fallthru
      _
    // Predicated region
    $region14: #{tpu_custom_call.1} parent=1 // pred_check
      _
    $region15: #{tpu_custom_call.1} parent=1 // pred_check_branch
      %36 = sbr.rel (0) target = $region17
    $region16: #{tpu_custom_call.1} parent=1 // pred_region
      %37 = dma.done [#allocation4], 256
    $region17: #{tpu_custom_call.1} parent=1 // pred_fallthru
      _
    %38 = vsyncpa [#allocation3], 1
    %39 = vsyncpa [#allocation4], 1

</llo_original>
